<compile_context>
chip_gen: v6e
topology: v6e:2x2x1
jax: 0.10.0
libtpu: 0.0.40
codegen_flags: <defaults>
</compile_context>

<pallas_src>
import functools

import jax
import jax.numpy as jnp
from jax.experimental import pallas as pl
from jax.experimental.pallas import tpu as pltpu


def _vmem_budgets():
    """Generation-aware VMEM budgets derived from physical VMEM capacity."""
    try:
        cap = int(pltpu.get_tpu_info().vmem_capacity_bytes)
    except Exception:
        cap = 0
    if cap < (16 << 20):                 # query failed / bogus -> conservative
        cap = 64 << 20                   # v7x per-TC capacity; safe everywhere
    fused_budget = (cap * 11) // 16      # ~88 MiB on 128-MiB chips, ~44 MiB on v7x
    vmem_limit = (cap * 25) // 32        # ~100 MiB / ~50 MiB scoped-VMEM request
    tile_budget = cap // 6               # ~21 MiB / ~10.7 MiB of live blocks
    return fused_budget, vmem_limit, tile_budget


def _round_tile(t, hw):
    """Round a lane-tile size to a legal value: multiple of 128 or full extent."""
    if t >= hw or hw <= 128:
        return hw
    return max((t // 128) * 128, 128)


def _pick_hw_tiles(hw, c, itemsize, tile_budget):
    """Lane-dense HW tiles for the two tiled passes.

    Pass 1 only double-buffers its input (the gate output is a (C,1) sliver),
    so it gets ~2x the tile of pass 2 (which double-buffers input + output).
    """
    t1 = _round_tile(max(tile_budget // (2 * c * itemsize), 128), hw)
    t2 = _round_tile(max(tile_budget // (4 * c * itemsize), 128), hw)
    return t1, t2


def _conv_sigmoid_gate(pad_ref, w_ref, c, inv_hw, out_dtype):
    """k=3 zero-padded channel conv + sigmoid from a (C+2, 1) f32 column.

    pad_ref rows 1..C hold the pooled *sums*; rows 0 and C+1 are zero, which
    supplies the conv zero-padding.  Mean scaling is folded in after the conv
    (linearity); `inv_hw` is a static Python float.
    """
    prev = pad_ref[pl.ds(0, c), :]      # y[c-1] (zero at c == 0)
    cur = pad_ref[pl.ds(1, c), :]       # y[c]
    nxt = pad_ref[pl.ds(2, c), :]       # y[c+1] (zero at c == C-1)
    conv = (w_ref[0, 0] * prev + w_ref[0, 1] * cur + w_ref[0, 2] * nxt) * inv_hw
    return jax.nn.sigmoid(conv).astype(out_dtype)


# ------------------------------ fused single-pass -----------------------------

def _eca_fused_kernel(w_ref, x_ref, o_ref, pad_ref, *, inv_hw):
    # Whole (1, C, HW) slab of one batch element.
    # w_ref: SMEM (1, 3) f32; pad_ref: VMEM (C+2, 1) f32 scratch.
    c = x_ref.shape[1]
    pad_ref[...] = jnp.zeros_like(pad_ref)
    # Global average pool over the lane (HW) axis, accumulated in f32.
    pad_ref[pl.ds(1, c), :] = jnp.sum(
        x_ref[0], axis=1, keepdims=True, dtype=jnp.float32)
    gate = _conv_sigmoid_gate(pad_ref, w_ref, c, inv_hw, o_ref.dtype)  # (C, 1)
    # Scale in the input dtype (no full-slab f32 copy).
    o_ref[0] = x_ref[0] * gate


def _run_fused(w, x3, B, C, HW, out_dtype, itemsize, vmem_limit, pipeline_mode):
    spec_kw = {} if pipeline_mode is None else {"pipeline_mode": pipeline_mode}
    return pl.pallas_call(
        functools.partial(_eca_fused_kernel, inv_hw=1.0 / HW),
        out_shape=jax.ShapeDtypeStruct((B, C, HW), out_dtype),
        grid_spec=pltpu.PrefetchScalarGridSpec(
            num_scalar_prefetch=0,
            grid=(B,),
            in_specs=[
                pl.BlockSpec(memory_space=pltpu.MemorySpace.SMEM),   # conv taps
                pl.BlockSpec((1, C, HW), lambda b: (b, 0, 0), **spec_kw),
            ],
            out_specs=pl.BlockSpec((1, C, HW), lambda b: (b, 0, 0), **spec_kw),
            scratch_shapes=[pltpu.VMEM((C + 2, 1), jnp.float32)],
        ),
        compiler_params=pltpu.CompilerParams(
            dimension_semantics=("parallel",),
            vmem_limit_bytes=vmem_limit,
        ),
        cost_estimate=pl.CostEstimate(
            flops=2 * B * C * HW,
            transcendentals=B * C,
            bytes_accessed=2 * B * C * HW * itemsize,
        ),
    )(w, x3)


# ------------------------------ tiled two-pass --------------------------------

def _eca_pool_gate_kernel(w_ref, x_ref, g_ref, acc_ref, *, hw, hw_tile, ragged):
    # Pass 1: accumulate per-channel sums over lane-dense HW tiles; on the
    # last tile compute conv + sigmoid gate.
    # x_ref: (1, C, hw_tile); g_ref: (1, C, 1); acc_ref: (C+2, 1) f32.
    h = pl.program_id(1)
    last = pl.num_programs(1) - 1
    c = x_ref.shape[1]

    @pl.when(h == 0)
    def _init():
        acc_ref[...] = jnp.zeros_like(acc_ref)

    def _accumulate(x):
        # Native-dtype tile; f32 accumulation happens inside the reduction only
        # (no materialized upcast copy of the block).
        part = jnp.sum(x, axis=1, keepdims=True, dtype=jnp.float32)   # (C, 1)
        acc_ref[pl.ds(1, c), :] = acc_ref[pl.ds(1, c), :] + part

    if ragged:
        # Mask only the last (partial) tile; all other tiles reduce unmasked.
        @pl.when(h != last)
        def _full_tile():
            _accumulate(x_ref[0])

        @pl.when(h == last)
        def _last_tile():
            lane = jax.lax.broadcasted_iota(jnp.int32, (1, hw_tile), 1)
            keep = (h * hw_tile + lane) < hw
            _accumulate(jnp.where(keep, x_ref[0], 0))
    else:
        _accumulate(x_ref[0])

    @pl.when(h == last)
    def _finalize():
        g_ref[0] = _conv_sigmoid_gate(acc_ref, w_ref, c, 1.0 / hw, g_ref.dtype)


def _eca_scale_kernel(x_ref, g_ref, o_ref):
    # Pass 2: out = x * gate, gate (C, 1) broadcast over the lane (HW) axis.
    o_ref[0] = x_ref[0] * g_ref[0]


# --------------------------------- wrapper ------------------------------------

def eca_forward(x, conv_weight, *, fused_budget_bytes=None, hw_tile=None):
    """ECA forward.

    x           : (B, C, *spatial)  (2-D or 3-D spatial, NCHW-style layout)
    conv_weight : (1, 1, 3) Conv1d(1, 1, 3, bias=False) weight
    hw_tile     : optional tiled-path override (rounded to a legal lane tile)
    """
    orig_shape = x.shape
    B, C = int(orig_shape[0]), int(orig_shape[1])
    HW = 1
    for d in orig_shape[2:]:
        HW *= int(d)

    x3 = x.reshape(B, C, HW)                       # contiguous reshape: free
    w = conv_weight.reshape(1, 3).astype(jnp.float32)
    itemsize = jnp.dtype(x.dtype).itemsize

    gen_fused_budget, vmem_limit, tile_budget = _vmem_budgets()
    if fused_budget_bytes is None:
        fused_budget_bytes = gen_fused_budget

    # Live-VMEM estimate for the fused path:
    #  - f32 inputs need no full-slab f32 temp (the f32 reduction is streaming);
    #    narrower dtypes conservatively budget one f32 slab for the upcast.
    #  - double-buffered in+out by default; single-buffered option when B == 1.
    extra_f32 = 0 if x.dtype == jnp.float32 else 4
    fused_live_double = C * HW * (4 * itemsize + extra_f32)
    fused_live_single = C * HW * (2 * itemsize + extra_f32)

    if fused_live_double <= fused_budget_bytes:
        # NOTE(v7x, B==1): grid=(B,) pins the fused pass to one TensorCore, but
        # HBM bandwidth is provisioned per-TC on v7x, so a single core still
        # saturates the stream; 2x-traffic fused beats 3x-traffic tiled.
        out3 = _run_fused(w, x3, B, C, HW, x.dtype, itemsize, vmem_limit, None)
        return out3.reshape(orig_shape)

    if B == 1 and fused_live_single <= fused_budget_bytes:
        # Only one grid step: double buffering is pure VMEM waste.  Request
        # single buffering; if this jax/Mosaic version rejects pipeline_mode,
        # fall through to the (still correct) tiled path.
        try:
            out3 = _run_fused(w, x3, B, C, HW, x.dtype, itemsize, vmem_limit,
                              pl.Buffered(1))
            return out3.reshape(orig_shape)
        except Exception:
            pass

    # ---------------- tiled two-pass path (bounded VMEM on any chip) ----------
    if hw_tile is not None:
        t1 = t2 = _round_tile(int(hw_tile), HW)
    else:
        t1, t2 = _pick_hw_tiles(HW, C, itemsize, tile_budget)
    n1 = pl.cdiv(HW, t1)
    n2 = pl.cdiv(HW, t2)
    ragged1 = (HW % t1) != 0

    # Pass 1: pooled sums (f32) over HW tiles -> per-channel gate (x.dtype).
    gate = pl.pallas_call(
        functools.partial(_eca_pool_gate_kernel, hw=HW, hw_tile=t1, ragged=ragged1),
        out_shape=jax.ShapeDtypeStruct((B, C, 1), x.dtype),
        grid_spec=pltpu.PrefetchScalarGridSpec(
            num_scalar_prefetch=0,
            grid=(B, n1),
            in_specs=[
                pl.BlockSpec(memory_space=pltpu.MemorySpace.SMEM),    # conv taps
                pl.BlockSpec((1, C, t1), lambda b, h: (b, 0, h)),
            ],
            out_specs=pl.BlockSpec((1, C, 1), lambda b, h: (b, 0, 0)),
            scratch_shapes=[pltpu.VMEM((C + 2, 1), jnp.float32)],
        ),
        compiler_params=pltpu.CompilerParams(
            dimension_semantics=("parallel", "arbitrary"),
            vmem_limit_bytes=vmem_limit,
        ),
        cost_estimate=pl.CostEstimate(
            flops=B * C * HW,
            transcendentals=B * C,
            bytes_accessed=B * C * HW * itemsize,
        ),
    )(w, x3)

    # Pass 2: elementwise x * gate, fully parallel grid (both v7x cores busy).
    out3 = pl.pallas_call(
        _eca_scale_kernel,
        out_shape=jax.ShapeDtypeStruct((B, C, HW), x.dtype),
        grid_spec=pltpu.PrefetchScalarGridSpec(
            num_scalar_prefetch=0,
            grid=(B, n2),
            in_specs=[
                pl.BlockSpec((1, C, t2), lambda b, h: (b, 0, h)),
                pl.BlockSpec((1, C, 1), lambda b, h: (b, 0, 0)),
            ],
            out_specs=pl.BlockSpec((1, C, t2), lambda b, h: (b, 0, h)),
        ),
        compiler_params=pltpu.CompilerParams(
            dimension_semantics=("parallel", "parallel"),
            vmem_limit_bytes=vmem_limit,
        ),
        cost_estimate=pl.CostEstimate(
            flops=B * C * HW,
            transcendentals=0,
            bytes_accessed=(2 * B * C * HW + B * C) * itemsize,
        ),
    )(x3, gate)
    return out3.reshape(orig_shape)


# --------------------------------- reference ----------------------------------

def _eca_reference(x, w):
    """Pure-JAX reference mirroring the PyTorch module (computed in f32)."""
    B, C = x.shape[0], x.shape[1]
    spatial_axes = tuple(range(2, x.ndim))
    y = jnp.mean(x.astype(jnp.float32), axis=spatial_axes)           # (B, C)
    k = w.reshape(3).astype(jnp.float32)
    yp = jnp.pad(y, ((0, 0), (1, 1)))                                # zero pad
    conv = k[0] * yp[:, 0:C] + k[1] * yp[:, 1:C + 1] + k[2] * yp[:, 2:C + 2]
    gate = jax.nn.sigmoid(conv)
    new_shape = (B, C) + (1,) * (x.ndim - 2)
    return x.astype(jnp.float32) * gate.reshape(new_shape)


if __name__ == "__main__":
    key = jax.random.PRNGKey(0)
    kx1, kw, kx2, kx3, kx4 = jax.random.split(key, 5)

    # Deterministic init for Conv1d(1, 1, 3, bias=False): U(-1/sqrt(3), 1/sqrt(3))
    bound = 1.0 / jnp.sqrt(3.0)
    conv_weight = jax.random.uniform(kw, (1, 1, 3), minval=-bound, maxval=bound,
                                     dtype=jnp.float32)

    # 1) Small f32 case -> fused single-pass kernel (generation-aware budget).
    x1 = jax.random.normal(kx1, (2, 4, 16, 16), dtype=jnp.float32)
    out1 = jax.block_until_ready(eca_forward(x1, conv_weight))
    assert out1.shape == x1.shape
    assert jnp.allclose(out1, _eca_reference(x1, conv_weight), atol=1e-5, rtol=1e-5)

    # 2) Force the tiled two-pass path: multi-tile HW with a ragged last tile.
    x2 = jax.random.normal(kx2, (2, 6, 16, 13), dtype=jnp.float32)
    out2 = jax.block_until_ready(
        eca_forward(x2, conv_weight, fused_budget_bytes=0, hw_tile=128))
    assert out2.shape == x2.shape
    assert jnp.allclose(out2, _eca_reference(x2, conv_weight), atol=1e-5, rtol=1e-5)

    # 3) bf16 input (f32 pooling accumulation inside the kernel), fused path.
    x3 = jax.random.normal(kx3, (1, 4, 8, 8), dtype=jnp.bfloat16)
    out3 = jax.block_until_ready(eca_forward(x3, conv_weight))
    assert out3.dtype == jnp.bfloat16
    assert jnp.allclose(out3.astype(jnp.float32), _eca_reference(x3, conv_weight),
                        atol=5e-2, rtol=5e-2)

    # 4) B == 1 with a budget where only single-buffered fused fits ->
    #    exercises the pl.Buffered(1) path (falls back to tiled if unsupported).
    x4 = jax.random.normal(kx4, (1, 8, 64, 128), dtype=jnp.float32)
    slab = 8 * 64 * 128 * 4
    out4 = jax.block_until_ready(
        eca_forward(x4, conv_weight, fused_budget_bytes=3 * slab))
    assert out4.shape == x4.shape
    assert jnp.allclose(out4, _eca_reference(x4, conv_weight), atol=1e-5, rtol=1e-5)

    print("KERNEL_OK")
</pallas_src>

<mosaic_0001>
module attributes {stable_mosaic.version = 11 : i64} {
  func.func @_eca_fused_kernel(%arg0: i32, %arg1: memref<1x3xf32, #tpu.memory_space<smem>>, %arg2: memref<1x4x256xf32, #tpu.memory_space<vmem>>, %arg3: memref<1x4x256xf32, #tpu.memory_space<vmem>>, %arg4: memref<6x1xf32, #tpu.memory_space<vmem>>) attributes {dimension_semantics = [#tpu.dimension_semantics<parallel>], iteration_bounds = array<i64: 2>, scalar_prefetch = 0 : i64, scratch_operands = 1 : i64, tpu.core_type = #tpu.core_type<tc>, window_params = [{transform_indices = @transform_0, window_bounds = array<i64: 1, 3>}, {transform_indices = @transform_1, window_bounds = array<i64: 1, 4, 256>}, {transform_indices = @transform_2, window_bounds = array<i64: 1, 4, 256>}]} {
    %cst = arith.constant 0.000000e+00 : f32
    %0 = vector.broadcast %cst : f32 to vector<6x1xf32>
    %c0 = arith.constant 0 : index
    %c0_0 = arith.constant 0 : index
    %1 = vector.load %arg4[%c0, %c0_0] : memref<6x1xf32, #tpu.memory_space<vmem>>, vector<6x1xf32>
    tpu.vector_store %arg4[%c0, %c0_0], %0 {strides = array<i32>} : memref<6x1xf32, #tpu.memory_space<vmem>>, vector<6x1xf32>,
    %c0_1 = arith.constant 0 : index
    %c0_2 = arith.constant 0 : index
    %c0_3 = arith.constant 0 : index
    %2 = vector.load %arg2[%c0_1, %c0_2, %c0_3] : memref<1x4x256xf32, #tpu.memory_space<vmem>>, vector<1x4x256xf32>
    %3 = vector.shape_cast %2 : vector<1x4x256xf32> to vector<4x256xf32>
    %cst_4 = arith.constant dense<0.000000e+00> : vector<4xf32>
    %4 = vector.multi_reduction <add>, %3, %cst_4 [1] : vector<4x256xf32> to vector<4xf32>
    %5 = vector.shape_cast %4 : vector<4xf32> to vector<4x1xf32>
    %c1 = arith.constant 1 : index
    %c0_5 = arith.constant 0 : index
    %6 = vector.load %arg4[%c1, %c0_5] : memref<6x1xf32, #tpu.memory_space<vmem>>, vector<4x1xf32>
    tpu.vector_store %arg4[%c1, %c0_5], %5 {strides = array<i32>} : memref<6x1xf32, #tpu.memory_space<vmem>>, vector<4x1xf32>,
    %c0_6 = arith.constant 0 : index
    %c0_7 = arith.constant 0 : index
    %7 = vector.load %arg4[%c0_6, %c0_7] : memref<6x1xf32, #tpu.memory_space<vmem>>, vector<4x1xf32>
    %c1_8 = arith.constant 1 : index
    %c0_9 = arith.constant 0 : index
    %8 = vector.load %arg4[%c1_8, %c0_9] : memref<6x1xf32, #tpu.memory_space<vmem>>, vector<4x1xf32>
    %c2 = arith.constant 2 : index
    %c0_10 = arith.constant 0 : index
    %9 = vector.load %arg4[%c2, %c0_10] : memref<6x1xf32, #tpu.memory_space<vmem>>, vector<4x1xf32>
    %c0_11 = arith.constant 0 : index
    %c0_12 = arith.constant 0 : index
    %10 = memref.load %arg1[%c0_11, %c0_12] : memref<1x3xf32, #tpu.memory_space<smem>>
    %11 = vector.broadcast %10 : f32 to vector<4x1xf32>
    %12 = arith.mulf %11, %7 : vector<4x1xf32>
    %c0_13 = arith.constant 0 : index
    %c1_14 = arith.constant 1 : index
    %13 = memref.load %arg1[%c0_13, %c1_14] : memref<1x3xf32, #tpu.memory_space<smem>>
    %14 = vector.broadcast %13 : f32 to vector<4x1xf32>
    %15 = arith.mulf %14, %8 : vector<4x1xf32>
    %16 = arith.addf %12, %15 : vector<4x1xf32>
    %c0_15 = arith.constant 0 : index
    %c2_16 = arith.constant 2 : index
    %17 = memref.load %arg1[%c0_15, %c2_16] : memref<1x3xf32, #tpu.memory_space<smem>>
    %18 = vector.broadcast %17 : f32 to vector<4x1xf32>
    %19 = arith.mulf %18, %9 : vector<4x1xf32>
    %20 = arith.addf %16, %19 : vector<4x1xf32>
    %cst_17 = arith.constant 3.906250e-03 : f32
    %21 = vector.broadcast %cst_17 : f32 to vector<4x1xf32>
    %22 = arith.mulf %20, %21 : vector<4x1xf32>
    %23 = arith.negf %22 : vector<4x1xf32>
    %24 = math.exp %23 : vector<4x1xf32>
    %cst_18 = arith.constant 1.000000e+00 : f32
    %25 = vector.broadcast %cst_18 : f32 to vector<4x1xf32>
    %26 = arith.addf %25, %24 : vector<4x1xf32>
    %27 = arith.divf %25, %26 : vector<4x1xf32>
    %c0_19 = arith.constant 0 : index
    %c0_20 = arith.constant 0 : index
    %c0_21 = arith.constant 0 : index
    %28 = vector.load %arg2[%c0_19, %c0_20, %c0_21] : memref<1x4x256xf32, #tpu.memory_space<vmem>>, vector<1x4x256xf32>
    %29 = vector.shape_cast %28 : vector<1x4x256xf32> to vector<4x256xf32>
    %30 = vector.broadcast %27 : vector<4x1xf32> to vector<4x256xf32>
    %31 = arith.mulf %29, %30 : vector<4x256xf32>
    %c0_22 = arith.constant 0 : index
    %c0_23 = arith.constant 0 : index
    %c0_24 = arith.constant 0 : index
    %32 = vector.load %arg3[%c0_22, %c0_23, %c0_24] : memref<1x4x256xf32, #tpu.memory_space<vmem>>, vector<1x4x256xf32>
    %33 = vector.shape_cast %32 : vector<1x4x256xf32> to vector<4x256xf32>
    %34 = vector.shape_cast %31 : vector<4x256xf32> to vector<1x4x256xf32>
    tpu.vector_store %arg3[%c0_22, %c0_23, %c0_24], %34 {strides = array<i32>} : memref<1x4x256xf32, #tpu.memory_space<vmem>>, vector<1x4x256xf32>,
    return
  }
  func.func @transform_0(%arg0: i32) -> (i32, i32) {
    %c0_i32 = arith.constant 0 : i32
    %c0_i32_0 = arith.constant 0 : i32
    %c0_i32_1 = arith.constant 0 : i32
    return %c0_i32, %c0_i32_0 : i32, i32
  }
  func.func @transform_1(%arg0: i32) -> (i32, i32, i32) {
    %c0_i32 = arith.constant 0 : i32
    %c0_i32_0 = arith.constant 0 : i32
    %c0_i32_1 = arith.constant 0 : i32
    return %arg0, %c0_i32, %c0_i32_0 : i32, i32, i32
  }
  func.func @transform_2(%arg0: i32) -> (i32, i32, i32) {
    %c0_i32 = arith.constant 0 : i32
    %c0_i32_0 = arith.constant 0 : i32
    %c0_i32_1 = arith.constant 0 : i32
    return %arg0, %c0_i32, %c0_i32_0 : i32, i32, i32
  }
}

</mosaic_0001>

<llo_original>
// kernel: tpu_custom_call.1
$region0: #{tpu_custom_call.1}
  #allocation0 [shape = 'u32[]', space=smem, size = 0x4, offset = 0x4, fixed_abs, tag = 'smem constant byte address 0x4 - core index']
  #allocation1 [shape = 'u32[144,128]{1,0:T(1,128)}', space=vmem, size = 0x12000, scoped, tag = 'internal scratch']
  #allocation2 [shape = 'f32[6,1]{1,0:T(8,128)}', space=vmem, size = 0x1000, scoped, tag = 'scratch operand']
  %s0 = inlined_call_operand.hbm [shape: f32[1,3], index: 0, kind: input, shape index: {}]
  %s1 = inlined_call_operand.hbm [shape: f32[2,4,256], index: 1, kind: input, shape index: {}]
  %s2 = inlined_call_operand.hbm [shape: f32[2,4,256], index: 2, kind: output, shape index: {}]
  %s3 = sld [smem:[#allocation0]]
  $region49: #{tpu_custom_call.1} parent=0
    _
  %s5 = ssub.s32 1, %s3
  %s6 = scalar_select 0, %s5, %s3
  $region1: #{tpu_custom_call.1} parent=0
    #allocation3 [shape = 'u8[512]{0}', space=smem, size = 0x200, scoped, tag = 'input window, operand 0, single buffered']
    #allocation4 [shape = 's32[2]{0}', space=sflag, size = 0x8, scoped, tag = 'scoped memory for tpu_custom_call.1']
    #allocation5 [shape = 's32[2]{0}', space=sflag, size = 0x8, scoped, tag = 'scoped memory for tpu_custom_call.1']
    #allocation6 [shape = 's32[2]{0}', space=sflag, size = 0x8, scoped, tag = 'scoped memory for tpu_custom_call.1']
    #allocation7 [shape = 'u8[8192]{0}', space=vmem, size = 0x2000, scoped, tag = 'input window, operand 1']
    #allocation8 [shape = 'u8[8192]{0}', space=vmem, size = 0x2000, scoped, tag = 'output window, operand 0']
    %7 = vsyncpa [#allocation6], 0
    %8 = vsyncpa [#allocation4], 0
    %s9 = scalar_lea.sflag [#allocation4], 1
    %10 = vsyncpa %s9, 0
    %11 = vsyncpa [#allocation5], 0
    %s12 = scalar_lea.sflag [#allocation5], 1
    %13 = vsyncpa %s12, 0
    loop: start=0, step=1, limit=4
    $region2: #{tpu_custom_call.1} parent=1 // loop_pre_header
      _
    $region3: #{tpu_custom_call.1} parent=1 // loop_header
      %s15 = sphi 0, %s19
      %p16 = scmp.ge.s32.totalorder %s15, 4
      %s23 = sphi 0, %s23
      %s25 = sphi 0, %s23
      %s26 = sphi 0, %s25
      %s40 = sphi 0, %s26
      %s46 = sphi 0, %s48
      %s49 = sphi 0, %s46
      %s50 = sphi 0, %s49
      %s66 = sphi 0, %s50
      %s72 = sphi 0, %s74
      %s75 = sphi 0, %s72
      %s76 = sphi 0, %s75
      %s92 = sphi 0, %s76
    $region4: #{tpu_custom_call.1} parent=1 // loop_header_branch
      %18 = sbr.rel (%p16) target = $region8
    $region5: #{tpu_custom_call.1} parent=1 // loop_body
      %s20 = ssub.s32 %s15, 1
      %s21 = ssub.s32 %s15, 2
      %s22 = sadd.s32 %s15, 1
      %s24 = sadd.s32 %s23, 1
      %p27 = scmp.eq.s32.totalorder %s15, 1
      %p28 = scmp.ne.s32.totalorder %s23, %s25
      %p29 = scmp.eq.s32.totalorder %s15, 0
      %p30 = por %p28, %p29
      %p31 = scmp.ne.s32.totalorder %s23, %s25
      %p32 = scmp.eq.s32.totalorder %s20, 1
      %p33 = por %p31, %p32
      %p34 = scmp.ne.s32.totalorder %s25, %s26
      %p35 = scmp.eq.s32.totalorder %s20, 0
      %p36 = por %p34, %p35
      %p37 = scmp.ne.s32.totalorder %s25, %s26
      %p38 = scmp.eq.s32.totalorder %s21, 1
      %p39 = por %p37, %p38
      %p41 = scmp.ne.s32.totalorder %s26, %s40
      %p42 = scmp.eq.s32.totalorder %s21, 0
      %p43 = por %p41, %p42
      %s44 = ssub.s32 %s15, %s22
      %p45 = scmp.eq.s32.totalorder %s44, 0
      %s47 = sadd.s32 %s46, 1
      %s48 = scalar_select %p45, %s46, %s47
      %p51 = pneg %p45
      %p52 = scmp.eq.s32.totalorder %s15, 1
      %p53 = por %p51, %p52
      %p54 = scmp.ne.s32.totalorder %s46, %s49
      %p55 = scmp.eq.s32.totalorder %s15, 0
      %p56 = por %p54, %p55
      %p57 = scmp.ne.s32.totalorder %s46, %s49
      %p58 = scmp.eq.s32.totalorder %s20, 1
      %p59 = por %p57, %p58
      %p60 = scmp.ne.s32.totalorder %s49, %s50
      %p61 = scmp.eq.s32.totalorder %s20, 0
      %p62 = por %p60, %p61
      %p63 = scmp.ne.s32.totalorder %s49, %s50
      %p64 = scmp.eq.s32.totalorder %s21, 1
      %p65 = por %p63, %p64
      %p67 = scmp.ne.s32.totalorder %s50, %s66
      %p68 = scmp.eq.s32.totalorder %s21, 0
      %p69 = por %p67, %p68
      %s70 = ssub.s32 %s15, %s22
      %p71 = scmp.eq.s32.totalorder %s70, 0
      %s73 = sadd.s32 %s72, 1
      %s74 = scalar_select %p71, %s72, %s73
      %p77 = pneg %p71
      %p78 = scmp.eq.s32.totalorder %s15, 1
      %p79 = por %p77, %p78
      %p80 = scmp.ne.s32.totalorder %s72, %s75
      %p81 = scmp.eq.s32.totalorder %s15, 0
      %p82 = por %p80, %p81
      %p83 = scmp.ne.s32.totalorder %s72, %s75
      %p84 = scmp.eq.s32.totalorder %s20, 1
      %p85 = por %p83, %p84
      %p86 = scmp.ne.s32.totalorder %s75, %s76
      %p87 = scmp.eq.s32.totalorder %s20, 0
      %p88 = por %p86, %p87
      %p89 = scmp.ne.s32.totalorder %s75, %s76
      %p90 = scmp.eq.s32.totalorder %s21, 1
      %p91 = por %p89, %p90
      %p93 = scmp.ne.s32.totalorder %s76, %s92
      %p94 = scmp.eq.s32.totalorder %s21, 0
      %p95 = por %p93, %p94
      %p96 = scmp.le.s32.totalorder 1, %s15
      %p97 = scmp.lt.s32.totalorder %s15, 3
      %p98 = pnand %p96, %p97
      %p99 = pneg %p98
      // Predicated region
      $region9: #{tpu_custom_call.1} parent=5 // pred_check
        _
      $region10: #{tpu_custom_call.1} parent=5 // pred_check_branch
        %101 = sbr.rel (%p98) target = $region12
      $region11: #{tpu_custom_call.1} parent=5 // pred_region
        %s102 = ssub.s32 %s15, 1
        // Predicated region
        $region13: #{tpu_custom_call.1} parent=11 // pred_check
          %p103 = pneg %p36
        $region14: #{tpu_custom_call.1} parent=11 // pred_check_branch
          %105 = sbr.rel (%p103) target = $region16
        $region15: #{tpu_custom_call.1} parent=11 // pred_region
          %s107 = ssub.s32 16, 16
          %108 = vsyncadd [#allocation6], %s107
          %111 = dma.hbm_to_smem %s0, 16, [#allocation3], [#allocation6]
        $region16: #{tpu_custom_call.1} parent=11 // pred_fallthru
          _
      $region12: #{tpu_custom_call.1} parent=5 // pred_fallthru
        _
      %p112 = scmp.lt.s32.totalorder %s15, 2
      // Predicated region
      $region17: #{tpu_custom_call.1} parent=5 // pred_check
        %p113 = pneg %p112
      $region18: #{tpu_custom_call.1} parent=5 // pred_check_branch
        %115 = sbr.rel (%p113) target = $region20
      $region19: #{tpu_custom_call.1} parent=5 // pred_region
        // Predicated region
        $region21: #{tpu_custom_call.1} parent=19 // pred_check
          %p116 = pneg %p56
        $region22: #{tpu_custom_call.1} parent=19 // pred_check_branch
          %118 = sbr.rel (%p116) target = $region24
        $region23: #{tpu_custom_call.1} parent=19 // pred_region
          %s119 = sand.u32 %s46, 1
          %s120 = scalar_lea.sflag [#allocation4], %s119
          %s121 = sand.u32 %s46, 1
          %s122 = smul.addr %s121, 8
          %s123 = scalar_lea.vmem [#allocation7], %s122
          %s125 = ssub.s32 128, 128
          %126 = vsyncadd %s120, %s125
          %s127 = smul.addr %s15, 2
          %s128 = smul.addr %s127, 64
          %s129 = scalar_lea.hbm %s1, %s128
          %s131 = sshll.u32 %s123, 4
          %s132 = int_to_ptr.vmem [resolvable:$true] %s131
          %134 = dma.hbm_to_vmem [thread:$0]  %s129, 128, %s132, %s120
        $region24: #{tpu_custom_call.1} parent=19 // pred_fallthru
          _
      $region20: #{tpu_custom_call.1} parent=5 // pred_fallthru
        _
      %p135 = scmp.le.s32.totalorder 1, %s15
      %p136 = scmp.lt.s32.totalorder %s15, 3
      %p137 = pnand %p135, %p136
      %p138 = pneg %p137
      // Predicated region
      $region25: #{tpu_custom_call.1} parent=5 // pred_check
        _
      $region26: #{tpu_custom_call.1} parent=5 // pred_check_branch
        %140 = sbr.rel (%p137) target = $region28
      $region27: #{tpu_custom_call.1} parent=5 // pred_region
        %s141 = ssub.s32 %s15, 1
        // Predicated region
        $region29: #{tpu_custom_call.1} parent=27 // pred_check
          %p142 = pneg %p36
        $region30: #{tpu_custom_call.1} parent=27 // pred_check_branch
          %144 = sbr.rel (%p142) target = $region32
        $region31: #{tpu_custom_call.1} parent=27 // pred_region
          %145 = dma.done [#allocation6], 16
        $region32: #{tpu_custom_call.1} parent=27 // pred_fallthru
          _
        %s146 = sand.u32 %s49, 1
        %s147 = scalar_lea.sflag [#allocation4], %s146
        %s148 = sand.u32 %s49, 1
        %s149 = smul.addr %s148, 8
        %s150 = scalar_lea.vmem [#allocation7], %s149
        // Predicated region
        $region33: #{tpu_custom_call.1} parent=27 // pred_check
          %p151 = pneg %p62
        $region34: #{tpu_custom_call.1} parent=27 // pred_check_branch
          %153 = sbr.rel (%p151) target = $region36
        $region35: #{tpu_custom_call.1} parent=27 // pred_region
          %154 = dma.done %s147, 128
        $region36: #{tpu_custom_call.1} parent=27 // pred_fallthru
          _
        %155 = sfence
        %p156 = pneg %p36
        %p157 = pneg %p33
        %s158 = sand.u32 %s49, 1
        %s159 = scalar_lea.sflag [#allocation4], %s158
        %s160 = sand.u32 %s49, 1
        %s161 = smul.addr %s160, 8
        %s162 = scalar_lea.vmem [#allocation7], %s161
        %p163 = pneg %p62
        %p164 = pneg %p59
        %p165 = pneg %p88
        %p166 = pneg %p85
        %s167 = sand.u32 %s75, 1
        %s168 = scalar_lea.sflag [#allocation5], %s167
        %s169 = sand.u32 %s75, 1
        %s170 = smul.addr %s169, 8
        %s171 = scalar_lea.vmem [#allocation8], %s170
        %vm172 = vcmask 5120
        %173 = vst.msk [vmem:[#allocation2] sm:$0x3f] %vm172, 0.0
        %v174 = vld [vmem:[%s150] sm:$0xff]
        %v176 = vcombine.high %v174, %v174
        %vm178 = vcmask 1043456
        %v179 = vsel %vm178, %v174, 0.0
        %v180 = vsel %vm178, %v176, 0.0
        %v181 = vadd.f32 %v179, %v180
        %182 = vadd.xlane.f32.xlu0 %v181
        %v183 = vpop.xlane.xlu0 %182
        %vm184 = vcmask 3072
        %185 = vst.msk [vmem:[#allocation2 + $0x1] sm:$0xf] %vm184, %v183
        %v186 = vld [vmem:[#allocation2] sm:$0xf]
        %v187 = vld [vmem:[#allocation2 + $0x1] sm:$0xf]
        %v188 = vld [vmem:[#allocation2 + $0x2] sm:$0xf]
        %s189 = sld [smem:[#allocation3]]
        %v190 = vstv %s189
        %v191 = vmul.f32 %v190, %v186
        %s192 = sld [smem:[#allocation3 + $0x1]]
        %v193 = vstv %s192
        %v194 = vmul.f32 %v193, %v187
        %v195 = vadd.f32 %v191, %v194
        %s196 = sld [smem:[#allocation3 + $0x2]]
        %v197 = vstv %s196
        %v198 = vmul.f32 %v197, %v188
        %v199 = vadd.f32 %v195, %v198
        %v200 = vmul.f32 %v199, 0.00390625
        %v201 = vxor.u32 %v200, 2147483648
        %v202 = vmul.f32 %v201, 1.442695
        %v203 = vpow.pop %v202
        %v204 = vadd.f32 %v203, 1.0
        %v205 = vrcp.pop %v204
        %v206 = vmul.f32 1.0, %v205
        %v207 = vld [vmem:[%s150] sm:$0xff]
        %209 = vset.pattern.permute.xlu0 0
        %210 = vperm.xlu0 %209, %v206
        %v211 = vpop.permute.xlu0 %210
        %v213 = vunpack.c.l.s4 839922192
        %v214 = vunpack.c.0.s8 %v213
        %v215 = vlaneseq
        %v216 = vshrl.u32 %v215, 7
        %v217 = vsub.s32 %v214, %v216
        %v218 = vrot.slane %v211, %v217
        %v220 = vmul.f32 %v207, %v218
        %221 = vst [vmem:[%s171] sm:$0xff] %v220
        %s222 = sand.u32 %s75, 1
        %s223 = scalar_lea.sflag [#allocation5], %s222
        %s224 = sand.u32 %s75, 1
        %s225 = smul.addr %s224, 8
        %s226 = scalar_lea.vmem [#allocation8], %s225
        // Predicated region
        $region37: #{tpu_custom_call.1} parent=27 // pred_check
          %p227 = pneg %p85
        $region38: #{tpu_custom_call.1} parent=27 // pred_check_branch
          %229 = sbr.rel (%p227) target = $region40
        $region39: #{tpu_custom_call.1} parent=27 // pred_region
          %s231 = ssub.s32 128, 128
          %232 = vsyncadd %s223, %s231
          %s233 = smul.addr %s20, 2
          %s234 = smul.addr %s233, 64
          %s235 = scalar_lea.hbm %s2, %s234
          %s237 = sshll.u32 %s226, 4
          %s238 = int_to_ptr.vmem [resolvable:$true] %s237
          %240 = dma.vmem_to_hbm [thread:$0]  %s238, 128, %s235, %s223
        $region40: #{tpu_custom_call.1} parent=27 // pred_fallthru
          _
      $region28: #{tpu_custom_call.1} parent=5 // pred_fallthru
        _
      %p241 = scmp.le.s32.totalorder 2, %s15
      // Predicated region
      $region41: #{tpu_custom_call.1} parent=5 // pred_check
        %p242 = pneg %p241
      $region42: #{tpu_custom_call.1} parent=5 // pred_check_branch
        %244 = sbr.rel (%p242) target = $region44
      $region43: #{tpu_custom_call.1} parent=5 // pred_region
        %s245 = ssub.s32 %s15, 2
        // Predicated region
        $region45: #{tpu_custom_call.1} parent=43 // pred_check
          %p246 = pneg %p91
        $region46: #{tpu_custom_call.1} parent=43 // pred_check_branch
          %248 = sbr.rel (%p246) target = $region48
        $region47: #{tpu_custom_call.1} parent=43 // pred_region
          %s249 = sand.u32 %s76, 1
          %s250 = scalar_lea.sflag [#allocation5], %s249
          %s251 = sand.u32 %s76, 1
          %s252 = smul.addr %s251, 8
          %s253 = scalar_lea.vmem [#allocation8], %s252
          %254 = dma.done %s250, 128
        $region48: #{tpu_custom_call.1} parent=43 // pred_fallthru
          _
      $region44: #{tpu_custom_call.1} parent=5 // pred_fallthru
        _
    $region6: #{tpu_custom_call.1} parent=1 // loop_footer
      %s19 = sadd.s32 1, %s15
    $region7: #{tpu_custom_call.1} parent=1 // loop_footer_branch
      %14 = sbr.rel target = $region3
    $region8: #{tpu_custom_call.1} parent=1 // loop_exit
      _
    %255 = vsyncpa [#allocation4], 1
    %s256 = scalar_lea.sflag [#allocation4], 1
    %257 = vsyncpa %s256, 1
    %258 = vsyncpa [#allocation5], 1
    %s259 = scalar_lea.sflag [#allocation5], 1
    %260 = vsyncpa %s259, 1
    %261 = vsyncpa [#allocation6], 1
    %s262 = scalar_lea.sflag [#allocation6], 1
    %263 = vsyncpa %s262, 1

</llo_original>
